<compile_context>
chip_gen: v7x
topology: tpu7x:2x2x1
jax: 0.10.0
libtpu: 0.0.40
codegen_flags: <defaults>
</compile_context>

<pallas_src>
import jax
import jax.numpy as jnp
from jax.experimental import pallas as pl
from jax.experimental.pallas import tpu as pltpu


IN_DIM = 47          # Deep.linear1 input features
HIDDEN = 256         # linear1/2/3 output features
MAX_TM = 1024        # batch-tile cap: x/out double buffers + weights + f32
                     # intermediates stay well under v5e's 16 MiB scoped VMEM


def _round_up(x, m):
    return ((x + m - 1) // m) * m


def _choose_tm(rows):
    """Batch tile size.

    Multiple of 16 (clean bf16 sublane packing), capped at MAX_TM, and sized to
    ~half the batch so the grid has >= 2 steps whenever possible (lets
    dimension_semantics=("parallel",) shard across v7x's two TensorCores).
    """
    if rows <= 16:
        return rows
    half = _round_up(pl.cdiv(rows, 2), 16)
    return min(MAX_TM, half)


# ---------------------------------------------------------------------------
# Pallas kernel: fused relu((relu((relu(x@W1+b1))@W2+b2))@W3+b3)
#   x tile:   [TM, 47]  f32   (batch-tiled, double-buffered; cast to bf16 here)
#   W1:       [47, 256] bf16  (resident across grid steps)
#   W2, W3:   [256,256] bf16  (resident across grid steps)
#   bias:     [8, 256]  f32   (rows 0..2 = b1,b2,b3; resident)
#   out tile: [TM, 256] bf16
# ---------------------------------------------------------------------------
def deep_mlp_kernel(x_ref, w1_ref, w2_ref, w3_ref, b_ref, o_ref):
    b1 = b_ref[0:1, :]
    b2 = b_ref[1:2, :]
    b3 = b_ref[2:3, :]

    x = x_ref[...].astype(jnp.bfloat16)
    h = jnp.dot(x, w1_ref[...], preferred_element_type=jnp.float32)
    h = jnp.maximum(h + b1, 0.0)
    # TODO(synk): dropout1 omitted (inference semantics).
    h = jnp.dot(h.astype(jnp.bfloat16), w2_ref[...],
                preferred_element_type=jnp.float32)
    h = jnp.maximum(h + b2, 0.0)
    # TODO(synk): dropout2 omitted (inference semantics).
    h = jnp.dot(h.astype(jnp.bfloat16), w3_ref[...],
                preferred_element_type=jnp.float32)
    o_ref[...] = jnp.maximum(h + b3, 0.0).astype(o_ref.dtype)


def deep_mlp(x, w1, w2, w3, bias):
    """x: [rows, 47] f32 (rows % 8 == 0) -> [rows, 256] bf16 fused 3-layer MLP."""
    rows, feat = x.shape
    assert feat == IN_DIM
    assert rows % 8 == 0

    tm = _choose_tm(rows)
    grid = (pl.cdiv(rows, tm),)   # ragged last tile is masked by Pallas

    flops = 2 * rows * (IN_DIM * HIDDEN + 2 * HIDDEN * HIDDEN)
    bytes_accessed = (
        rows * IN_DIM * 4                       # f32 input
        + (w1.size + w2.size + w3.size) * 2     # bf16 weights
        + bias.size * 4                         # f32 biases
        + rows * HIDDEN * 2                     # bf16 output
    )

    return pl.pallas_call(
        deep_mlp_kernel,
        out_shape=jax.ShapeDtypeStruct((rows, HIDDEN), jnp.bfloat16),
        grid=grid,
        in_specs=[
            pl.BlockSpec((tm, IN_DIM), lambda i: (i, 0)),      # x (batch-tiled)
            pl.BlockSpec((IN_DIM, HIDDEN), lambda i: (0, 0)),  # W1 resident
            pl.BlockSpec((HIDDEN, HIDDEN), lambda i: (0, 0)),  # W2 resident
            pl.BlockSpec((HIDDEN, HIDDEN), lambda i: (0, 0)),  # W3 resident
            pl.BlockSpec((8, HIDDEN), lambda i: (0, 0)),       # packed biases
        ],
        out_specs=pl.BlockSpec((tm, HIDDEN), lambda i: (i, 0)),
        compiler_params=pltpu.CompilerParams(
            dimension_semantics=("parallel",),
        ),
        cost_estimate=pl.CostEstimate(
            flops=flops, transcendentals=0, bytes_accessed=bytes_accessed
        ),
    )(x, w1, w2, w3, bias)


# ---------------------------------------------------------------------------
# Parameter init (mirrors nn.Linear default init; weights stored [in, out]).
# Weights bf16 (MXU-native, halves weight HBM traffic); biases packed f32.
# ---------------------------------------------------------------------------
def init_params(key):
    def linear_init(k, fan_in, fan_out):
        kw, kb = jax.random.split(k)
        bound = 1.0 / (fan_in ** 0.5)
        w = jax.random.uniform(kw, (fan_in, fan_out),
                               minval=-bound, maxval=bound, dtype=jnp.float32)
        b = jax.random.uniform(kb, (fan_out,),
                               minval=-bound, maxval=bound, dtype=jnp.float32)
        return w, b

    k1, k2, k3 = jax.random.split(key, 3)
    w1, b1 = linear_init(k1, IN_DIM, HIDDEN)
    w2, b2 = linear_init(k2, HIDDEN, HIDDEN)
    w3, b3 = linear_init(k3, HIDDEN, HIDDEN)

    bias = (jnp.zeros((8, HIDDEN), jnp.float32)
            .at[0].set(b1).at[1].set(b2).at[2].set(b3))

    return {
        "w1": w1.astype(jnp.bfloat16),
        "w2": w2.astype(jnp.bfloat16),
        "w3": w3.astype(jnp.bfloat16),
        "bias": bias,
    }


# ---------------------------------------------------------------------------
# Forward pass (glue: flatten + minimal 8-row pad; hot path: Pallas fused MLP)
# ---------------------------------------------------------------------------
@jax.jit
def deep_forward(params, dense):
    B = dense.shape[0]
    x = dense.reshape(B, -1).astype(jnp.float32)          # nn.Flatten(1)
    assert x.shape[1] == IN_DIM

    rows = _round_up(B, 8)                                 # sublane alignment only
    if rows != B:
        x = jnp.pad(x, ((0, rows - B), (0, 0)))

    out = deep_mlp(x, params["w1"], params["w2"], params["w3"], params["bias"])
    return out[:B]                                         # [B, 256] bf16


# ---------------------------------------------------------------------------
# Pure-JAX reference (same bf16 weight/activation quantization, f32 accumulate)
# ---------------------------------------------------------------------------
def deep_forward_ref(params, dense):
    B = dense.shape[0]
    x = dense.reshape(B, -1).astype(jnp.float32).astype(jnp.bfloat16)
    h = jnp.dot(x, params["w1"], preferred_element_type=jnp.float32)
    h = jnp.maximum(h + params["bias"][0:1], 0.0)
    h = jnp.dot(h.astype(jnp.bfloat16), params["w2"],
                preferred_element_type=jnp.float32)
    h = jnp.maximum(h + params["bias"][1:2], 0.0)
    h = jnp.dot(h.astype(jnp.bfloat16), params["w3"],
                preferred_element_type=jnp.float32)
    h = jnp.maximum(h + params["bias"][2:3], 0.0)
    return h.astype(jnp.bfloat16)


if __name__ == "__main__":
    key = jax.random.PRNGKey(0)
    pkey, ikey = jax.random.split(key)
    params = init_params(pkey)

    B = 2
    dense = jax.random.normal(ikey, (B, IN_DIM), dtype=jnp.float32)

    out = jax.block_until_ready(deep_forward(params, dense))
    ref = deep_forward_ref(params, dense)

    assert out.shape == (B, HIDDEN), out.shape
    assert out.dtype == jnp.bfloat16, out.dtype
    assert jnp.allclose(out.astype(jnp.float32), ref.astype(jnp.float32),
                        atol=2e-2, rtol=2e-2), "mismatch vs reference"

    print("KERNEL_OK")
</pallas_src>

<mosaic_0001>
module attributes {stable_mosaic.version = 11 : i64} {
  func.func @deep_mlp_kernel(%arg0: i32, %arg1: memref<8x47xf32, #tpu.memory_space<vmem>>, %arg2: memref<47x256xbf16, #tpu.memory_space<vmem>>, %arg3: memref<256x256xbf16, #tpu.memory_space<vmem>>, %arg4: memref<256x256xbf16, #tpu.memory_space<vmem>>, %arg5: memref<8x256xf32, #tpu.memory_space<vmem>>, %arg6: memref<8x256xbf16, #tpu.memory_space<vmem>>) attributes {dimension_semantics = [#tpu.dimension_semantics<parallel>], iteration_bounds = array<i64: 1>, scalar_prefetch = 0 : i64, scratch_operands = 0 : i64, tpu.core_type = #tpu.core_type<tc>, window_params = [{transform_indices = @transform_0, window_bounds = array<i64: 8, 47>}, {pipeline_mode = #tpu.pipeline_mode<synchronous>, transform_indices = @transform_1, window_bounds = array<i64: 47, 256>}, {pipeline_mode = #tpu.pipeline_mode<synchronous>, transform_indices = @transform_2, window_bounds = array<i64: 256, 256>}, {pipeline_mode = #tpu.pipeline_mode<synchronous>, transform_indices = @transform_3, window_bounds = array<i64: 256, 256>}, {pipeline_mode = #tpu.pipeline_mode<synchronous>, transform_indices = @transform_4, window_bounds = array<i64: 8, 256>}, {transform_indices = @transform_5, window_bounds = array<i64: 8, 256>}]} {
    %c0 = arith.constant 0 : index
    %c0_0 = arith.constant 0 : index
    %0 = vector.load %arg5[%c0, %c0_0] : memref<8x256xf32, #tpu.memory_space<vmem>>, vector<1x256xf32>
    %c1 = arith.constant 1 : index
    %c0_1 = arith.constant 0 : index
    %1 = vector.load %arg5[%c1, %c0_1] : memref<8x256xf32, #tpu.memory_space<vmem>>, vector<1x256xf32>
    %c2 = arith.constant 2 : index
    %c0_2 = arith.constant 0 : index
    %2 = vector.load %arg5[%c2, %c0_2] : memref<8x256xf32, #tpu.memory_space<vmem>>, vector<1x256xf32>
    %c0_3 = arith.constant 0 : index
    %c0_4 = arith.constant 0 : index
    %3 = vector.load %arg1[%c0_3, %c0_4] : memref<8x47xf32, #tpu.memory_space<vmem>>, vector<8x47xf32>
    %4 = arith.truncf %3 : vector<8x47xf32> to vector<8x47xbf16>
    %c0_5 = arith.constant 0 : index
    %c0_6 = arith.constant 0 : index
    %5 = vector.load %arg2[%c0_5, %c0_6] : memref<47x256xbf16, #tpu.memory_space<vmem>>, vector<47x256xbf16>
    %cst = arith.constant dense<0.000000e+00> : vector<8x256xf32>
    %6 = tpu.matmul %4, %5, %cst {dimension_numbers = #tpu.dot_dimension_numbers<[1], [0], [0], [1], [0, 0, 1, 1], [], []>} : vector<8x47xbf16>, vector<47x256xbf16>, vector<8x256xf32> -> vector<8x256xf32>
    %7 = vector.broadcast %0 : vector<1x256xf32> to vector<8x256xf32>
    %8 = arith.addf %6, %7 : vector<8x256xf32>
    %cst_7 = arith.constant 0.000000e+00 : f32
    %9 = vector.broadcast %cst_7 : f32 to vector<8x256xf32>
    %10 = arith.maximumf %8, %9 : vector<8x256xf32>
    %11 = arith.truncf %10 : vector<8x256xf32> to vector<8x256xbf16>
    %c0_8 = arith.constant 0 : index
    %c0_9 = arith.constant 0 : index
    %12 = vector.load %arg3[%c0_8, %c0_9] : memref<256x256xbf16, #tpu.memory_space<vmem>>, vector<256x256xbf16>
    %cst_10 = arith.constant dense<0.000000e+00> : vector<8x256xf32>
    %13 = tpu.matmul %11, %12, %cst_10 {dimension_numbers = #tpu.dot_dimension_numbers<[1], [0], [0], [1], [0, 0, 1, 1], [], []>} : vector<8x256xbf16>, vector<256x256xbf16>, vector<8x256xf32> -> vector<8x256xf32>
    %14 = vector.broadcast %1 : vector<1x256xf32> to vector<8x256xf32>
    %15 = arith.addf %13, %14 : vector<8x256xf32>
    %cst_11 = arith.constant 0.000000e+00 : f32
    %16 = vector.broadcast %cst_11 : f32 to vector<8x256xf32>
    %17 = arith.maximumf %15, %16 : vector<8x256xf32>
    %18 = arith.truncf %17 : vector<8x256xf32> to vector<8x256xbf16>
    %c0_12 = arith.constant 0 : index
    %c0_13 = arith.constant 0 : index
    %19 = vector.load %arg4[%c0_12, %c0_13] : memref<256x256xbf16, #tpu.memory_space<vmem>>, vector<256x256xbf16>
    %cst_14 = arith.constant dense<0.000000e+00> : vector<8x256xf32>
    %20 = tpu.matmul %18, %19, %cst_14 {dimension_numbers = #tpu.dot_dimension_numbers<[1], [0], [0], [1], [0, 0, 1, 1], [], []>} : vector<8x256xbf16>, vector<256x256xbf16>, vector<8x256xf32> -> vector<8x256xf32>
    %21 = vector.broadcast %2 : vector<1x256xf32> to vector<8x256xf32>
    %22 = arith.addf %20, %21 : vector<8x256xf32>
    %cst_15 = arith.constant 0.000000e+00 : f32
    %23 = vector.broadcast %cst_15 : f32 to vector<8x256xf32>
    %24 = arith.maximumf %22, %23 : vector<8x256xf32>
    %25 = arith.truncf %24 : vector<8x256xf32> to vector<8x256xbf16>
    %c0_16 = arith.constant 0 : index
    %c0_17 = arith.constant 0 : index
    %26 = vector.load %arg6[%c0_16, %c0_17] : memref<8x256xbf16, #tpu.memory_space<vmem>>, vector<8x256xbf16>
    tpu.vector_store %arg6[%c0_16, %c0_17], %25 {strides = array<i32>} : memref<8x256xbf16, #tpu.memory_space<vmem>>, vector<8x256xbf16>,
    return
  }
  func.func @transform_0(%arg0: i32) -> (i32, i32) {
    %c0_i32 = arith.constant 0 : i32
    %c0_i32_0 = arith.constant 0 : i32
    return %arg0, %c0_i32 : i32, i32
  }
  func.func @transform_1(%arg0: i32) -> (i32, i32) {
    %c0_i32 = arith.constant 0 : i32
    %c0_i32_0 = arith.constant 0 : i32
    %c0_i32_1 = arith.constant 0 : i32
    return %c0_i32, %c0_i32_0 : i32, i32
  }
  func.func @transform_2(%arg0: i32) -> (i32, i32) {
    %c0_i32 = arith.constant 0 : i32
    %c0_i32_0 = arith.constant 0 : i32
    %c0_i32_1 = arith.constant 0 : i32
    return %c0_i32, %c0_i32_0 : i32, i32
  }
  func.func @transform_3(%arg0: i32) -> (i32, i32) {
    %c0_i32 = arith.constant 0 : i32
    %c0_i32_0 = arith.constant 0 : i32
    %c0_i32_1 = arith.constant 0 : i32
    return %c0_i32, %c0_i32_0 : i32, i32
  }
  func.func @transform_4(%arg0: i32) -> (i32, i32) {
    %c0_i32 = arith.constant 0 : i32
    %c0_i32_0 = arith.constant 0 : i32
    %c0_i32_1 = arith.constant 0 : i32
    return %c0_i32, %c0_i32_0 : i32, i32
  }
  func.func @transform_5(%arg0: i32) -> (i32, i32) {
    %c0_i32 = arith.constant 0 : i32
    %c0_i32_0 = arith.constant 0 : i32
    return %arg0, %c0_i32 : i32, i32
  }
}

</mosaic_0001>

<llo_original>
// kernel: deep_forward.1
$region0: #{deep_forward.1}
  #allocation0 [shape = 'u32[]', space=smem, size = 0x4, offset = 0x4, fixed_abs, tag = 'smem constant byte address 0x4 - core index']
  #allocation1 [shape = 'u32[144,128]{1,0:T(1,128)}', space=vmem, size = 0x12000, scoped, tag = 'internal scratch']
  %s0 = inlined_call_operand.vmem [shape: f32[8,47], index: 0, kind: input, shape index: {}]
  %s1 = inlined_call_operand.hbm [shape: bf16[47,256], index: 1, kind: input, shape index: {}]
  %s2 = inlined_call_operand.hbm [shape: bf16[256,256], index: 2, kind: input, shape index: {}]
  %s3 = inlined_call_operand.hbm [shape: bf16[256,256], index: 3, kind: input, shape index: {}]
  %s4 = inlined_call_operand.hbm [shape: f32[8,256], index: 4, kind: input, shape index: {}]
  %s5 = inlined_call_operand.vmem [shape: bf16[8,256], index: 5, kind: output, shape index: {}]
  %s6 = sld [smem:[#allocation0]]
  $region46: #{deep_forward.1} parent=0
    _
  %s8 = ssub.s32 1, %s6
  %s9 = scalar_select 0, %s8, %s6
  $region1: #{deep_forward.1} parent=0
    #allocation2 [shape = 'u8[24576]{0}', space=vmem, size = 0x6000, scoped, tag = 'input window, operand 1, single buffered']
    #allocation3 [shape = 's32[1]{0}', space=sflag, size = 0x4, scoped, tag = 'scoped memory for deep_forward.1']
    #allocation4 [shape = 'u8[131072]{0}', space=vmem, size = 0x20000, scoped, tag = 'input window, operand 2, single buffered']
    #allocation5 [shape = 's32[1]{0}', space=sflag, size = 0x4, scoped, tag = 'scoped memory for deep_forward.1']
    #allocation6 [shape = 'u8[131072]{0}', space=vmem, size = 0x20000, scoped, tag = 'input window, operand 3, single buffered']
    #allocation7 [shape = 'u8[8192]{0}', space=vmem, size = 0x2000, scoped, tag = 'input window, operand 4, single buffered']
    #allocation8 [shape = 's32[1]{0}', space=sflag, size = 0x4, scoped, tag = 'scoped memory for deep_forward.1']
    %10 = vsyncpa [#allocation3], 0
    %11 = vsyncpa [#allocation5], 0
    %12 = vsyncpa [#allocation8], 0
    // Predicated region
    $region2: #{deep_forward.1} parent=1 // pred_check
      _
    $region3: #{deep_forward.1} parent=1 // pred_check_branch
      %14 = sbr.rel (0) target = $region5
    $region4: #{deep_forward.1} parent=1 // pred_region
      _
    $region5: #{deep_forward.1} parent=1 // pred_fallthru
      _
    // Predicated region
    $region6: #{deep_forward.1} parent=1 // pred_check
      _
    $region7: #{deep_forward.1} parent=1 // pred_check_branch
      %16 = sbr.rel (0) target = $region9
    $region8: #{deep_forward.1} parent=1 // pred_region
      %s18 = ssub.s32 768, 768
      %19 = vsyncadd [#allocation3], %s18
      %s20 = sshll.u32 [#allocation2], 4
      %s21 = int_to_ptr.vmem [resolvable:$true] %s20
      %26 = dma.hbm_to_vmem [thread:$0]  %s1, 768, %s21, [#allocation3], 128, 128, 8
    $region9: #{deep_forward.1} parent=1 // pred_fallthru
      _
    // Predicated region
    $region10: #{deep_forward.1} parent=1 // pred_check
      _
    $region11: #{deep_forward.1} parent=1 // pred_check_branch
      %28 = sbr.rel (0) target = $region13
    $region12: #{deep_forward.1} parent=1 // pred_region
      %s30 = ssub.s32 4096, 4096
      %31 = vsyncadd [#allocation5], %s30
      %s32 = sshll.u32 [#allocation4], 4
      %s33 = int_to_ptr.vmem [resolvable:$true] %s32
      %38 = dma.hbm_to_vmem [thread:$0]  %s2, 4096, %s33, [#allocation5], 128, 128, 8
    $region13: #{deep_forward.1} parent=1 // pred_fallthru
      _
    // Predicated region
    $region14: #{deep_forward.1} parent=1 // pred_check
      _
    $region15: #{deep_forward.1} parent=1 // pred_check_branch
      %40 = sbr.rel (0) target = $region17
    $region16: #{deep_forward.1} parent=1 // pred_region
      %s42 = ssub.s32 4096, 4096
      %43 = vsyncadd [#allocation5], %s42
      %s44 = sshll.u32 [#allocation6], 4
      %s45 = int_to_ptr.vmem [resolvable:$true] %s44
      %50 = dma.hbm_to_vmem [thread:$0]  %s3, 4096, %s45, [#allocation5], 128, 128, 8
    $region17: #{deep_forward.1} parent=1 // pred_fallthru
      _
    // Predicated region
    $region18: #{deep_forward.1} parent=1 // pred_check
      _
    $region19: #{deep_forward.1} parent=1 // pred_check_branch
      %52 = sbr.rel (0) target = $region21
    $region20: #{deep_forward.1} parent=1 // pred_region
      %s54 = ssub.s32 256, 256
      %55 = vsyncadd [#allocation8], %s54
      %s57 = sshll.u32 [#allocation7], 4
      %s58 = int_to_ptr.vmem [resolvable:$true] %s57
      %60 = dma.hbm_to_vmem [thread:$0]  %s4, 256, %s58, [#allocation8]
    $region21: #{deep_forward.1} parent=1 // pred_fallthru
      _
    // Predicated region
    $region22: #{deep_forward.1} parent=1 // pred_check
      _
    $region23: #{deep_forward.1} parent=1 // pred_check_branch
      %62 = sbr.rel (0) target = $region25
    $region24: #{deep_forward.1} parent=1 // pred_region
      %63 = dma.done [#allocation3], 768
    $region25: #{deep_forward.1} parent=1 // pred_fallthru
      _
    // Predicated region
    $region26: #{deep_forward.1} parent=1 // pred_check
      _
    $region27: #{deep_forward.1} parent=1 // pred_check_branch
      %65 = sbr.rel (0) target = $region29
    $region28: #{deep_forward.1} parent=1 // pred_region
      %66 = dma.done [#allocation5], 4096
    $region29: #{deep_forward.1} parent=1 // pred_fallthru
      _
    // Predicated region
    $region30: #{deep_forward.1} parent=1 // pred_check
      _
    $region31: #{deep_forward.1} parent=1 // pred_check_branch
      %68 = sbr.rel (0) target = $region33
    $region32: #{deep_forward.1} parent=1 // pred_region
      %69 = dma.done [#allocation5], 4096
    $region33: #{deep_forward.1} parent=1 // pred_fallthru
      _
    // Predicated region
    $region34: #{deep_forward.1} parent=1 // pred_check
      _
    $region35: #{deep_forward.1} parent=1 // pred_check_branch
      %71 = sbr.rel (0) target = $region37
    $region36: #{deep_forward.1} parent=1 // pred_region
      %72 = dma.done [#allocation8], 256
    $region37: #{deep_forward.1} parent=1 // pred_fallthru
      _
    %v74 = vld [vmem:[#allocation7] ss:$8 sm:$0x3]
    %s75 = scalar_lea.vmem [#allocation7], 1
    %v76 = vld [vmem:[%s75] ss:$8 sm:$0x3]
    %s77 = scalar_lea.vmem [#allocation7], 2
    %v78 = vld [vmem:[%s77] ss:$8 sm:$0x3]
    %v79 = vld [vmem:[%s0] sm:$0xff]
    %v80 = vpack.c.bf16 %v79, %v79
    %v81 = vld [vmem:[#allocation2] sm:$0xff]
    %v82 = vld [vmem:[#allocation2 + $0x8] sm:$0xff]
    %v83 = vld [vmem:[#allocation2 + $0x10] sm:$0xff]
    %v84 = vld [vmem:[#allocation2 + $0x18] sm:$0xff]
    %v85 = vld [vmem:[#allocation2 + $0x20] sm:$0xff]
    %v86 = vld [vmem:[#allocation2 + $0x28] sm:$0xff]
    %v88 = vlaneseq
    %v89 = vshrl.u32 %v88, 7
    %v90 = vsub.s32 0, %v89
    %v91 = vrot.slane %v74, %v90
    %v92 = vlaneseq
    %v93 = vshrl.u32 %v92, 7
    %v94 = vsub.s32 1, %v93
    %v95 = vrot.slane %v74, %v94
    %v104 = vunpack.c.l.b16 %v81
    %v105 = vunpack.c.h.b16 %v81
    %v106 = vunpack.c.l.b16 %v82
    %v107 = vunpack.c.h.b16 %v82
    %v108 = vunpack.c.l.b16 %v83
    %v109 = vunpack.c.h.b16 %v83
    %v110 = vunpack.c.l.b16 %v84
    %v111 = vunpack.c.h.b16 %v84
    %v112 = vunpack.c.l.b16 %v85
    %v113 = vunpack.c.h.b16 %v85
    %v114 = vunpack.c.l.b16 %v86
    %v115 = vunpack.c.h.b16 %v86
    %v116 = vpack.c.b16 %v106, %v104
    %v117 = vpack.c.b16 %v107, %v105
    %v118 = vpack.c.b16 %v110, %v108
    %v119 = vpack.c.b16 %v111, %v109
    %v120 = vpack.c.b16 %v114, %v112
    %v121 = vpack.c.b16 %v115, %v113
    %vm126 = vcmask 384000
    %v128 = vsel %vm126, %v80, 0
    %vm130 = vcmask 1046528
    %vm131 = vcmask 1047552
    %v132 = vsel %vm130, 4294967295, 65535
    %v133 = vsel %vm131, %v132, 0
    %v135 = vand.u32 %v120, %v133
    %v138 = vand.u32 %v121, %v133
    %140 = vmatprep.subr.bf16.mxu0 %v117
    %141 = vmatpush1.bf16.msra.mxu0 %v116
    %142 = vmatprep.subr.bf16.mxu0 %v119
    %143 = vmatpush1.bf16.msra.mxu0 %v118
    %144 = vmatprep.subr.bf16.mxu0 %v138
    %145 = vmatpush1.bf16.msra.mxu0 %v135
    %146 = vmatprep.subr.bf16.mxu0 0
    %147 = vmatpush1.bf16.msra.mxu0 0
    %148 = vmatprep.subr.bf16.mxu0 0
    %149 = vmatpush1.bf16.msra.mxu0 0
    %150 = vmatprep.subr.bf16.mxu0 0
    %151 = vmatpush1.bf16.msra.mxu0 0
    %152 = vmatprep.subr.bf16.mxu0 0
    %153 = vmatpush1.bf16.msra.mxu0 0
    %154 = vmatprep.subr.bf16.mxu0 0
    %155 = vmatpush1.bf16.msra.mxu0 0
    %156 = vmatprep.subr.bf16.mxu0 0
    %157 = vmatpush1.bf16.msra.mxu0 0
    %158 = vmatprep.subr.bf16.mxu0 0
    %159 = vmatpush1.bf16.msra.mxu0 0
    %160 = vmatprep.subr.bf16.mxu0 0
    %161 = vmatpush1.bf16.msra.mxu0 0
    %162 = vmatprep.subr.bf16.mxu0 0
    %163 = vmatpush1.bf16.msra.mxu0 0
    %164 = vmatprep.subr.bf16.mxu0 0
    %165 = vmatpush1.bf16.msra.mxu0 0
    %166 = vmatprep.subr.bf16.mxu0 0
    %167 = vmatpush1.bf16.msra.mxu0 0
    %168 = vmatprep.subr.bf16.mxu0 0
    %169 = vmatpush1.bf16.msra.mxu0 0
    %170 = vmatprep.subr.bf16.mxu0 0
    %171 = vmatpush1.bf16.msra.mxu0 0
    %172 = vmatprep.mubr.bf16.mxu0 0
    %173 = vmatmul.mubr.bf16.gmra.mrb[0].mxu0 %v128
    %v174 = vpop.f32.mrb[0].mxu0
    %v175 = vadd.f32 %v91, %v174
    %v176 = vpop.f32.mrb[0].mxu0
    %v177 = vadd.f32 %v95, %v176
    %v178 = vpop.f32.mrb[0].mxu0
    %v179 = vpop.f32.mrb[0].mxu0
    %180 = vdwg.mxu0
    %v181 = vmax.f32 %v175, 0.0
    %v182 = vmax.f32 %v177, 0.0
    %v183 = vpack.c.bf16 %v181, %v181
    %v184 = vpack.c.bf16 %v182, %v182
    %v185 = vld [vmem:[#allocation4] sm:$0xff]
    %v186 = vld [vmem:[#allocation4 + $0x8] sm:$0xff]
    %v187 = vld [vmem:[#allocation4 + $0x10] sm:$0xff]
    %v188 = vld [vmem:[#allocation4 + $0x18] sm:$0xff]
    %v189 = vld [vmem:[#allocation4 + $0x20] sm:$0xff]
    %v190 = vld [vmem:[#allocation4 + $0x28] sm:$0xff]
    %v191 = vld [vmem:[#allocation4 + $0x30] sm:$0xff]
    %v192 = vld [vmem:[#allocation4 + $0x38] sm:$0xff]
    %v193 = vld [vmem:[#allocation4 + $0x40] sm:$0xff]
    %v194 = vld [vmem:[#allocation4 + $0x48] sm:$0xff]
    %v195 = vld [vmem:[#allocation4 + $0x50] sm:$0xff]
    %v196 = vld [vmem:[#allocation4 + $0x58] sm:$0xff]
    %v197 = vld [vmem:[#allocation4 + $0x60] sm:$0xff]
    %v198 = vld [vmem:[#allocation4 + $0x68] sm:$0xff]
    %v199 = vld [vmem:[#allocation4 + $0x70] sm:$0xff]
    %v200 = vld [vmem:[#allocation4 + $0x78] sm:$0xff]
    %v201 = vld [vmem:[#allocation4 + $0x80] sm:$0xff]
    %v202 = vld [vmem:[#allocation4 + $0x88] sm:$0xff]
    %v203 = vld [vmem:[#allocation4 + $0x90] sm:$0xff]
    %v204 = vld [vmem:[#allocation4 + $0x98] sm:$0xff]
    %v205 = vld [vmem:[#allocation4 + $0xa0] sm:$0xff]
    %v206 = vld [vmem:[#allocation4 + $0xa8] sm:$0xff]
    %v207 = vld [vmem:[#allocation4 + $0xb0] sm:$0xff]
    %v208 = vld [vmem:[#allocation4 + $0xb8] sm:$0xff]
    %v209 = vld [vmem:[#allocation4 + $0xc0] sm:$0xff]
    %v210 = vld [vmem:[#allocation4 + $0xc8] sm:$0xff]
    %v211 = vld [vmem:[#allocation4 + $0xd0] sm:$0xff]
    %v212 = vld [vmem:[#allocation4 + $0xd8] sm:$0xff]
    %v213 = vld [vmem:[#allocation4 + $0xe0] sm:$0xff]
    %v214 = vld [vmem:[#allocation4 + $0xe8] sm:$0xff]
    %v215 = vld [vmem:[#allocation4 + $0xf0] sm:$0xff]
    %v216 = vld [vmem:[#allocation4 + $0xf8] sm:$0xff]
    %v218 = vlaneseq
    %v219 = vshrl.u32 %v218, 7
    %v220 = vsub.s32 0, %v219
    %v221 = vrot.slane %v76, %v220
    %v222 = vlaneseq
    %v223 = vshrl.u32 %v222, 7
    %v224 = vsub.s32 1, %v223
    %v225 = vrot.slane %v76, %v224
    %v260 = vunpack.c.l.b16 %v185
    %v261 = vunpack.c.h.b16 %v185
    %v262 = vunpack.c.l.b16 %v186
    %v263 = vunpack.c.h.b16 %v186
    %v264 = vunpack.c.l.b16 %v187
    %v265 = vunpack.c.h.b16 %v187
    %v266 = vunpack.c.l.b16 %v188
    %v267 = vunpack.c.h.b16 %v188
    %v268 = vunpack.c.l.b16 %v189
    %v269 = vunpack.c.h.b16 %v189
    %v270 = vunpack.c.l.b16 %v190
    %v271 = vunpack.c.h.b16 %v190
    %v272 = vunpack.c.l.b16 %v191
    %v273 = vunpack.c.h.b16 %v191
    %v274 = vunpack.c.l.b16 %v192
    %v275 = vunpack.c.h.b16 %v192
    %v276 = vunpack.c.l.b16 %v193
    %v277 = vunpack.c.h.b16 %v193
    %v278 = vunpack.c.l.b16 %v194
    %v279 = vunpack.c.h.b16 %v194
    %v280 = vunpack.c.l.b16 %v195
    %v281 = vunpack.c.h.b16 %v195
    %v282 = vunpack.c.l.b16 %v196
    %v283 = vunpack.c.h.b16 %v196
    %v284 = vunpack.c.l.b16 %v197
    %v285 = vunpack.c.h.b16 %v197
    %v286 = vunpack.c.l.b16 %v198
    %v287 = vunpack.c.h.b16 %v198
    %v288 = vunpack.c.l.b16 %v199
    %v289 = vunpack.c.h.b16 %v199
    %v290 = vunpack.c.l.b16 %v200
    %v291 = vunpack.c.h.b16 %v200
    %v292 = vunpack.c.l.b16 %v201
    %v293 = vunpack.c.h.b16 %v201
    %v294 = vunpack.c.l.b16 %v202
    %v295 = vunpack.c.h.b16 %v202
    %v296 = vunpack.c.l.b16 %v203
    %v297 = vunpack.c.h.b16 %v203
    %v298 = vunpack.c.l.b16 %v204
    %v299 = vunpack.c.h.b16 %v204
    %v300 = vunpack.c.l.b16 %v205
    %v301 = vunpack.c.h.b16 %v205
    %v302 = vunpack.c.l.b16 %v206
    %v303 = vunpack.c.h.b16 %v206
    %v304 = vunpack.c.l.b16 %v207
    %v305 = vunpack.c.h.b16 %v207
    %v306 = vunpack.c.l.b16 %v208
    %v307 = vunpack.c.h.b16 %v208
    %v308 = vunpack.c.l.b16 %v209
    %v309 = vunpack.c.h.b16 %v209
    %v310 = vunpack.c.l.b16 %v210
    %v311 = vunpack.c.h.b16 %v210
    %v312 = vunpack.c.l.b16 %v211
    %v313 = vunpack.c.h.b16 %v211
    %v314 = vunpack.c.l.b16 %v212
    %v315 = vunpack.c.h.b16 %v212
    %v316 = vunpack.c.l.b16 %v213
    %v317 = vunpack.c.h.b16 %v213
    %v318 = vunpack.c.l.b16 %v214
    %v319 = vunpack.c.h.b16 %v214
    %v320 = vunpack.c.l.b16 %v215
    %v321 = vunpack.c.h.b16 %v215
    %v322 = vunpack.c.l.b16 %v216
    %v323 = vunpack.c.h.b16 %v216
    %v324 = vpack.c.b16 %v262, %v260
    %v325 = vpack.c.b16 %v263, %v261
    %v326 = vpack.c.b16 %v266, %v264
    %v327 = vpack.c.b16 %v267, %v265
    %v328 = vpack.c.b16 %v270, %v268
    %v329 = vpack.c.b16 %v271, %v269
    %v330 = vpack.c.b16 %v274, %v272
    %v331 = vpack.c.b16 %v275, %v273
    %v332 = vpack.c.b16 %v278, %v276
    %v333 = vpack.c.b16 %v279, %v277
    %v334 = vpack.c.b16 %v282, %v280
    %v335 = vpack.c.b16 %v283, %v281
    %v336 = vpack.c.b16 %v286, %v284
    %v337 = vpack.c.b16 %v287, %v285
    %v338 = vpack.c.b16 %v290, %v288
    %v339 = vpack.c.b16 %v291, %v289
    %v340 = vpack.c.b16 %v294, %v292
    %v341 = vpack.c.b16 %v295, %v293
    %v342 = vpack.c.b16 %v298, %v296
    %v343 = vpack.c.b16 %v299, %v297
    %v344 = vpack.c.b16 %v302, %v300
    %v345 = vpack.c.b16 %v303, %v301
    %v346 = vpack.c.b16 %v306, %v304
    %v347 = vpack.c.b16 %v307, %v305
    %v348 = vpack.c.b16 %v310, %v308
    %v349 = vpack.c.b16 %v311, %v309
    %v350 = vpack.c.b16 %v314, %v312
    %v351 = vpack.c.b16 %v315, %v313
    %v352 = vpack.c.b16 %v318, %v316
    %v353 = vpack.c.b16 %v319, %v317
    %v354 = vpack.c.b16 %v322, %v320
    %v355 = vpack.c.b16 %v323, %v321
    %388 = vmatprep.subr.bf16.mxu0 %v325
    %389 = vmatpush1.bf16.msra.mxu0 %v324
    %390 = vmatprep.subr.bf16.mxu0 %v327
    %391 = vmatpush1.bf16.msra.mxu0 %v326
    %392 = vmatprep.subr.bf16.mxu0 %v329
    %393 = vmatpush1.bf16.msra.mxu0 %v328
    %394 = vmatprep.subr.bf16.mxu0 %v331
    %395 = vmatpush1.bf16.msra.mxu0 %v330
    %396 = vmatprep.subr.bf16.mxu0 %v333
    %397 = vmatpush1.bf16.msra.mxu0 %v332
    %398 = vmatprep.subr.bf16.mxu0 %v335
    %399 = vmatpush1.bf16.msra.mxu0 %v334
    %400 = vmatprep.subr.bf16.mxu0 %v337
    %401 = vmatpush1.bf16.msra.mxu0 %v336
    %402 = vmatprep.subr.bf16.mxu0 %v339
    %403 = vmatpush1.bf16.msra.mxu0 %v338
    %404 = vmatprep.subr.bf16.mxu0 %v341
    %405 = vmatpush1.bf16.msra.mxu0 %v340
    %406 = vmatprep.subr.bf16.mxu0 %v343
    %407 = vmatpush1.bf16.msra.mxu0 %v342
    %408 = vmatprep.subr.bf16.mxu0 %v345
    %409 = vmatpush1.bf16.msra.mxu0 %v344
    %410 = vmatprep.subr.bf16.mxu0 %v347
    %411 = vmatpush1.bf16.msra.mxu0 %v346
    %412 = vmatprep.subr.bf16.mxu0 %v349
    %413 = vmatpush1.bf16.msra.mxu0 %v348
    %414 = vmatprep.subr.bf16.mxu0 %v351
    %415 = vmatpush1.bf16.msra.mxu0 %v350
    %416 = vmatprep.subr.bf16.mxu0 %v353
    %417 = vmatpush1.bf16.msra.mxu0 %v352
    %418 = vmatprep.subr.bf16.mxu0 %v355
    %419 = vmatpush1.bf16.msra.mxu0 %v354
    %420 = vmatprep.mubr.bf16.mxu0 %v184
    %421 = vmatmul.mubr.bf16.gmra.mrb[0].mxu0 %v183
    %v422 = vpop.f32.mrb[0].mxu0
    %v423 = vadd.f32 %v221, %v422
    %v424 = vpop.f32.mrb[0].mxu0
    %v425 = vadd.f32 %v225, %v424
    %v426 = vpop.f32.mrb[0].mxu0
    %v427 = vpop.f32.mrb[0].mxu0
    %428 = vdwg.mxu0
    %v429 = vmax.f32 %v423, 0.0
    %v430 = vmax.f32 %v425, 0.0
    %v431 = vpack.c.bf16 %v429, %v429
    %v432 = vpack.c.bf16 %v430, %v430
    %v433 = vld [vmem:[#allocation6] sm:$0xff]
    %v434 = vld [vmem:[#allocation6 + $0x8] sm:$0xff]
    %v435 = vld [vmem:[#allocation6 + $0x10] sm:$0xff]
    %v436 = vld [vmem:[#allocation6 + $0x18] sm:$0xff]
    %v437 = vld [vmem:[#allocation6 + $0x20] sm:$0xff]
    %v438 = vld [vmem:[#allocation6 + $0x28] sm:$0xff]
    %v439 = vld [vmem:[#allocation6 + $0x30] sm:$0xff]
    %v440 = vld [vmem:[#allocation6 + $0x38] sm:$0xff]
    %v441 = vld [vmem:[#allocation6 + $0x40] sm:$0xff]
    %v442 = vld [vmem:[#allocation6 + $0x48] sm:$0xff]
    %v443 = vld [vmem:[#allocation6 + $0x50] sm:$0xff]
    %v444 = vld [vmem:[#allocation6 + $0x58] sm:$0xff]
    %v445 = vld [vmem:[#allocation6 + $0x60] sm:$0xff]
    %v446 = vld [vmem:[#allocation6 + $0x68] sm:$0xff]
    %v447 = vld [vmem:[#allocation6 + $0x70] sm:$0xff]
    %v448 = vld [vmem:[#allocation6 + $0x78] sm:$0xff]
    %v449 = vld [vmem:[#allocation6 + $0x80] sm:$0xff]
    %v450 = vld [vmem:[#allocation6 + $0x88] sm:$0xff]
    %v451 = vld [vmem:[#allocation6 + $0x90] sm:$0xff]
    %v452 = vld [vmem:[#allocation6 + $0x98] sm:$0xff]
    %v453 = vld [vmem:[#allocation6 + $0xa0] sm:$0xff]
    %v454 = vld [vmem:[#allocation6 + $0xa8] sm:$0xff]
    %v455 = vld [vmem:[#allocation6 + $0xb0] sm:$0xff]
    %v456 = vld [vmem:[#allocation6 + $0xb8] sm:$0xff]
    %v457 = vld [vmem:[#allocation6 + $0xc0] sm:$0xff]
    %v458 = vld [vmem:[#allocation6 + $0xc8] sm:$0xff]
    %v459 = vld [vmem:[#allocation6 + $0xd0] sm:$0xff]
    %v460 = vld [vmem:[#allocation6 + $0xd8] sm:$0xff]
    %v461 = vld [vmem:[#allocation6 + $0xe0] sm:$0xff]
    %v462 = vld [vmem:[#allocation6 + $0xe8] sm:$0xff]
    %v463 = vld [vmem:[#allocation6 + $0xf0] sm:$0xff]
    %v464 = vld [vmem:[#allocation6 + $0xf8] sm:$0xff]
    %v466 = vlaneseq
    %v467 = vshrl.u32 %v466, 7
    %v468 = vsub.s32 0, %v467
    %v469 = vrot.slane %v78, %v468
    %v470 = vlaneseq
    %v471 = vshrl.u32 %v470, 7
    %v472 = vsub.s32 1, %v471
    %v473 = vrot.slane %v78, %v472
    %v508 = vunpack.c.l.b16 %v433
    %v509 = vunpack.c.h.b16 %v433
    %v510 = vunpack.c.l.b16 %v434
    %v511 = vunpack.c.h.b16 %v434
    %v512 = vunpack.c.l.b16 %v435
    %v513 = vunpack.c.h.b16 %v435
    %v514 = vunpack.c.l.b16 %v436
    %v515 = vunpack.c.h.b16 %v436
    %v516 = vunpack.c.l.b16 %v437
    %v517 = vunpack.c.h.b16 %v437
    %v518 = vunpack.c.l.b16 %v438
    %v519 = vunpack.c.h.b16 %v438
    %v520 = vunpack.c.l.b16 %v439
    %v521 = vunpack.c.h.b16 %v439
    %v522 = vunpack.c.l.b16 %v440
    %v523 = vunpack.c.h.b16 %v440
    %v524 = vunpack.c.l.b16 %v441
    %v525 = vunpack.c.h.b16 %v441
    %v526 = vunpack.c.l.b16 %v442
    %v527 = vunpack.c.h.b16 %v442
    %v528 = vunpack.c.l.b16 %v443
    %v529 = vunpack.c.h.b16 %v443
    %v530 = vunpack.c.l.b16 %v444
    %v531 = vunpack.c.h.b16 %v444
    %v532 = vunpack.c.l.b16 %v445
    %v533 = vunpack.c.h.b16 %v445
    %v534 = vunpack.c.l.b16 %v446
    %v535 = vunpack.c.h.b16 %v446
    %v536 = vunpack.c.l.b16 %v447
    %v537 = vunpack.c.h.b16 %v447
    %v538 = vunpack.c.l.b16 %v448
    %v539 = vunpack.c.h.b16 %v448
    %v540 = vunpack.c.l.b16 %v449
    %v541 = vunpack.c.h.b16 %v449
    %v542 = vunpack.c.l.b16 %v450
    %v543 = vunpack.c.h.b16 %v450
    %v544 = vunpack.c.l.b16 %v451
    %v545 = vunpack.c.h.b16 %v451
    %v546 = vunpack.c.l.b16 %v452
    %v547 = vunpack.c.h.b16 %v452
    %v548 = vunpack.c.l.b16 %v453
    %v549 = vunpack.c.h.b16 %v453
    %v550 = vunpack.c.l.b16 %v454
    %v551 = vunpack.c.h.b16 %v454
    %v552 = vunpack.c.l.b16 %v455
    %v553 = vunpack.c.h.b16 %v455
    %v554 = vunpack.c.l.b16 %v456
    %v555 = vunpack.c.h.b16 %v456
    %v556 = vunpack.c.l.b16 %v457
    %v557 = vunpack.c.h.b16 %v457
    %v558 = vunpack.c.l.b16 %v458
    %v559 = vunpack.c.h.b16 %v458
    %v560 = vunpack.c.l.b16 %v459
    %v561 = vunpack.c.h.b16 %v459
    %v562 = vunpack.c.l.b16 %v460
    %v563 = vunpack.c.h.b16 %v460
    %v564 = vunpack.c.l.b16 %v461
    %v565 = vunpack.c.h.b16 %v461
    %v566 = vunpack.c.l.b16 %v462
    %v567 = vunpack.c.h.b16 %v462
    %v568 = vunpack.c.l.b16 %v463
    %v569 = vunpack.c.h.b16 %v463
    %v570 = vunpack.c.l.b16 %v464
    %v571 = vunpack.c.h.b16 %v464
    %v572 = vpack.c.b16 %v510, %v508
    %v573 = vpack.c.b16 %v511, %v509
    %v574 = vpack.c.b16 %v514, %v512
    %v575 = vpack.c.b16 %v515, %v513
    %v576 = vpack.c.b16 %v518, %v516
    %v577 = vpack.c.b16 %v519, %v517
    %v578 = vpack.c.b16 %v522, %v520
    %v579 = vpack.c.b16 %v523, %v521
    %v580 = vpack.c.b16 %v526, %v524
    %v581 = vpack.c.b16 %v527, %v525
    %v582 = vpack.c.b16 %v530, %v528
    %v583 = vpack.c.b16 %v531, %v529
    %v584 = vpack.c.b16 %v534, %v532
    %v585 = vpack.c.b16 %v535, %v533
    %v586 = vpack.c.b16 %v538, %v536
    %v587 = vpack.c.b16 %v539, %v537
    %v588 = vpack.c.b16 %v542, %v540
    %v589 = vpack.c.b16 %v543, %v541
    %v590 = vpack.c.b16 %v546, %v544
    %v591 = vpack.c.b16 %v547, %v545
    %v592 = vpack.c.b16 %v550, %v548
    %v593 = vpack.c.b16 %v551, %v549
    %v594 = vpack.c.b16 %v554, %v552
    %v595 = vpack.c.b16 %v555, %v553
    %v596 = vpack.c.b16 %v558, %v556
    %v597 = vpack.c.b16 %v559, %v557
    %v598 = vpack.c.b16 %v562, %v560
    %v599 = vpack.c.b16 %v563, %v561
    %v600 = vpack.c.b16 %v566, %v564
    %v601 = vpack.c.b16 %v567, %v565
    %v602 = vpack.c.b16 %v570, %v568
    %v603 = vpack.c.b16 %v571, %v569
    %636 = vmatprep.subr.bf16.mxu0 %v573
    %637 = vmatpush1.bf16.msra.mxu0 %v572
    %638 = vmatprep.subr.bf16.mxu0 %v575
    %639 = vmatpush1.bf16.msra.mxu0 %v574
    %640 = vmatprep.subr.bf16.mxu0 %v577
    %641 = vmatpush1.bf16.msra.mxu0 %v576
    %642 = vmatprep.subr.bf16.mxu0 %v579
    %643 = vmatpush1.bf16.msra.mxu0 %v578
    %644 = vmatprep.subr.bf16.mxu0 %v581
    %645 = vmatpush1.bf16.msra.mxu0 %v580
    %646 = vmatprep.subr.bf16.mxu0 %v583
    %647 = vmatpush1.bf16.msra.mxu0 %v582
    %648 = vmatprep.subr.bf16.mxu0 %v585
    %649 = vmatpush1.bf16.msra.mxu0 %v584
    %650 = vmatprep.subr.bf16.mxu0 %v587
    %651 = vmatpush1.bf16.msra.mxu0 %v586
    %652 = vmatprep.subr.bf16.mxu0 %v589
    %653 = vmatpush1.bf16.msra.mxu0 %v588
    %654 = vmatprep.subr.bf16.mxu0 %v591
    %655 = vmatpush1.bf16.msra.mxu0 %v590
    %656 = vmatprep.subr.bf16.mxu0 %v593
    %657 = vmatpush1.bf16.msra.mxu0 %v592
    %658 = vmatprep.subr.bf16.mxu0 %v595
    %659 = vmatpush1.bf16.msra.mxu0 %v594
    %660 = vmatprep.subr.bf16.mxu0 %v597
    %661 = vmatpush1.bf16.msra.mxu0 %v596
    %662 = vmatprep.subr.bf16.mxu0 %v599
    %663 = vmatpush1.bf16.msra.mxu0 %v598
    %664 = vmatprep.subr.bf16.mxu0 %v601
    %665 = vmatpush1.bf16.msra.mxu0 %v600
    %666 = vmatprep.subr.bf16.mxu0 %v603
    %667 = vmatpush1.bf16.msra.mxu0 %v602
    %668 = vmatprep.mubr.bf16.mxu0 %v432
    %669 = vmatmul.mubr.bf16.gmra.mrb[0].mxu0 %v431
    %v670 = vpop.f32.mrb[0].mxu0
    %v671 = vadd.f32 %v469, %v670
    %v672 = vpop.f32.mrb[0].mxu0
    %v673 = vadd.f32 %v473, %v672
    %v674 = vpop.f32.mrb[0].mxu0
    %v675 = vpop.f32.mrb[0].mxu0
    %676 = vdwg.mxu0
    %v677 = vmax.f32 %v671, 0.0
    %v678 = vmax.f32 %v673, 0.0
    %v679 = vpack.c.bf16 %v677, %v677
    %v680 = vpack.c.bf16 %v678, %v678
    %v683 = vunpack.c.l.b16 %v679
    %v684 = vunpack.c.l.b16 %v680
    %v685 = vpack.c.b16 %v684, %v683
    %687 = vst [vmem:[%s5] sm:$0xff] %v685
    // Predicated region
    $region38: #{deep_forward.1} parent=1 // pred_check
      _
    $region39: #{deep_forward.1} parent=1 // pred_check_branch
      %689 = sbr.rel (0) target = $region41
    $region40: #{deep_forward.1} parent=1 // pred_region
      _
    $region41: #{deep_forward.1} parent=1 // pred_fallthru
      _
    // Predicated region
    $region42: #{deep_forward.1} parent=1 // pred_check
      _
    $region43: #{deep_forward.1} parent=1 // pred_check_branch
      %691 = sbr.rel (0) target = $region45
    $region44: #{deep_forward.1} parent=1 // pred_region
      _
    $region45: #{deep_forward.1} parent=1 // pred_fallthru
      _
    %692 = vsyncpa [#allocation3], 1
    %693 = vsyncpa [#allocation5], 1
    %694 = vsyncpa [#allocation8], 1

</llo_original>
